<compile_context>
chip_gen: v7x
topology: tpu7x:2x2x1
jax: 0.10.0
libtpu: 0.0.40
codegen_flags: <defaults>
</compile_context>

<pallas_src>
import functools
import math

import jax
import jax.numpy as jnp
from jax.experimental import pallas as pl
from jax.experimental.pallas import tpu as pltpu

_EPS = 1e-12  # F.normalize default eps


# ---------------------------------------------------------------------------
# Kernels
# ---------------------------------------------------------------------------
def _adacos_logits_kernel(x_ref, wt_ref, xinv_ref, winv_ref, logits_ref):
    """Inference path (label is None): cosine logits only.

    x_ref:    (TILE_B, F)   matmul dtype (bf16 by default)
    wt_ref:   (F, TILE_C)   matmul dtype (MXU-native (K, N) layout)
    xinv_ref: (TILE_B, 1)   f32 inverse row norms of x   (0 for padded rows)
    winv_ref: (1, TILE_C)   f32 inverse class norms of W (0 for padded cols)
    """
    raw = jnp.dot(x_ref[...], wt_ref[...], preferred_element_type=jnp.float32)
    # Post-matmul L2 normalization: outer product of inverse norms (f32 VPU).
    logits_ref[...] = (raw * xinv_ref[...]) * winv_ref[...]


def _adacos_train_kernel(s_init, x_ref, wt_ref, xinv_ref, winv_ref,
                         logits_ref, exp_ref):
    """Training path: logits + lane-dense partial sums of exp(s*logits).

    exp_ref: (1, 1, TILE_C) f32 column-sums of exp(s_init * logits) for this
    (bi, cj) tile.  No one-hot / label work and no padded-column masking here:
    padded logits are exactly 0 so their exp(0)=1 contributions (and the label
    column's contribution) are removed with cheap O(B) math in the JAX tail.
    """
    raw = jnp.dot(x_ref[...], wt_ref[...], preferred_element_type=jnp.float32)
    logits = (raw * xinv_ref[...]) * winv_ref[...]          # (TILE_B, TILE_C)
    logits_ref[...] = logits

    e = jnp.exp(s_init * logits)                            # f32, EUP slot
    exp_ref[...] = jnp.sum(e, axis=0, keepdims=True)[None]  # (1, 1, TILE_C)


# ---------------------------------------------------------------------------
# Tiling helpers
# ---------------------------------------------------------------------------
def _tile_and_pad(dim, pref, align):
    """Full-dim tile when dim <= pref, else an `align`-multiple tile + pad."""
    if dim <= pref:
        return dim, dim
    tile = max(align, (pref // align) * align)
    padded = -(-dim // tile) * tile
    return tile, padded


def _default_tile_c(num_features, itemsize):
    """Largest TILE_C (<=2048, 128-multiple) keeping the weight tile <=8 MiB."""
    budget = 8 * 1024 * 1024
    cap = (budget // (num_features * itemsize)) // 128 * 128
    return int(max(128, min(2048, cap)))


def _weight_spec(feat, tile_c, buffered):
    index_map = lambda cj, bi: (0, cj)
    if buffered:
        # Deeper buffering of the streamed weight tiles hides DMA latency on
        # bandwidth-limited parts (v5e).  Fall back if unsupported.
        try:
            return pl.BlockSpec((feat, tile_c), index_map,
                                pipeline_mode=pl.Buffered(3))
        except Exception:
            pass
    return pl.BlockSpec((feat, tile_c), index_map)


# ---------------------------------------------------------------------------
# Weight preparation (cacheable across calls while the weight is unchanged)
# ---------------------------------------------------------------------------
def adacos_prepare_weight(weight, *, tile_c=None, matmul_dtype=jnp.bfloat16):
    """One-time (F, C_pad) transpose/cast + inverse class norms.

    Cache the returned dict while the weight has not changed to avoid the
    per-call full passes over the (C, F) weight (the dominant extra HBM
    traffic for large num_classes).
    """
    C, F = weight.shape
    mm_dtype = jnp.dtype(matmul_dtype)
    pref_c = tile_c if tile_c is not None else _default_tile_c(F, mm_dtype.itemsize)
    TC, C_pad = _tile_and_pad(C, pref_c, 128)

    wf = weight.astype(jnp.float32)
    w_inv = 1.0 / jnp.maximum(jnp.sqrt(jnp.sum(wf * wf, axis=1)), _EPS)  # (C,)
    wt = weight.T.astype(mm_dtype)                                        # (F, C)
    if C_pad != C:
        wt = jnp.pad(wt, ((0, 0), (0, C_pad - C)))        # zero padded classes
        w_inv = jnp.pad(w_inv, (0, C_pad - C))            # 0 -> padded logits = 0
    return dict(wt=wt, w_inv=w_inv.reshape(1, C_pad),
                num_classes=C, num_features=F, C_pad=C_pad, TC=TC,
                matmul_dtype=mm_dtype)


# ---------------------------------------------------------------------------
# Forward wrapper (matches AdaCos.forward(input, label); m is unused)
# ---------------------------------------------------------------------------
def adacos_forward(x, weight=None, label=None, m=0.5, *,
                   tile_b=None, tile_c=None, matmul_dtype=jnp.bfloat16,
                   prepared_weight=None, return_scale=False):
    del m  # unused, as in the PyTorch module
    if prepared_weight is None:
        prepared_weight = adacos_prepare_weight(
            weight, tile_c=tile_c, matmul_dtype=matmul_dtype)
    pw = prepared_weight

    B, F = x.shape
    assert F == pw["num_features"]
    C, C_pad, TC = pw["num_classes"], pw["C_pad"], pw["TC"]
    mm_dtype = pw["matmul_dtype"]
    nc = C_pad // TC

    # Batch tiling: full-B tile (nb==1, no padding copy) up to 256, else 256.
    pref_b = tile_b if tile_b is not None else 256
    TB, B_pad = _tile_and_pad(B, pref_b, 8)
    nb = B_pad // TB

    s_init = math.sqrt(2.0) * math.log(C - 1) if C > 1 else 1.0

    xf = x.astype(jnp.float32)
    x_inv = 1.0 / jnp.maximum(
        jnp.sqrt(jnp.sum(xf * xf, axis=1, keepdims=True)), _EPS)   # (B, 1)
    x_mm = x.astype(mm_dtype)                                       # (B, F)
    if B_pad != B:
        x_mm = jnp.pad(x_mm, ((0, B_pad - B), (0, 0)))
        x_inv = jnp.pad(x_inv, ((0, B_pad - B), (0, 0)))   # 0 -> padded logits = 0

    # Grid = (nc, nb): bi innermost, so the (F, TILE_C) weight tile's block
    # index is constant across inner steps and W is streamed from HBM once.
    x_spec = pl.BlockSpec((TB, F), lambda cj, bi: (bi, 0))
    wt_spec = _weight_spec(F, TC, buffered=(nc > 1))
    xinv_spec = pl.BlockSpec((TB, 1), lambda cj, bi: (bi, 0))
    winv_spec = pl.BlockSpec((1, TC), lambda cj, bi: (0, cj))
    logits_spec = pl.BlockSpec((TB, TC), lambda cj, bi: (bi, cj))

    compiler_params = pltpu.CompilerParams(
        dimension_semantics=("parallel", "parallel"),   # megacore-shardable
        vmem_limit_bytes=32 * 1024 * 1024,
    )

    if label is None:
        logits = pl.pallas_call(
            _adacos_logits_kernel,
            out_shape=jax.ShapeDtypeStruct((B_pad, C_pad), jnp.float32),
            grid=(nc, nb),
            in_specs=[x_spec, wt_spec, xinv_spec, winv_spec],
            out_specs=logits_spec,
            compiler_params=compiler_params,
        )(x_mm, pw["wt"], x_inv, pw["w_inv"])
        if B_pad != B or C_pad != C:
            logits = logits[:B, :C]
        return logits

    kernel = functools.partial(_adacos_train_kernel, float(s_init))
    logits_pad, exp_parts = pl.pallas_call(
        kernel,
        out_shape=(
            jax.ShapeDtypeStruct((B_pad, C_pad), jnp.float32),
            jax.ShapeDtypeStruct((nb, 1, C_pad), jnp.float32),  # exp partials
        ),
        grid=(nc, nb),
        in_specs=[x_spec, wt_spec, xinv_spec, winv_spec],
        out_specs=(
            logits_spec,
            pl.BlockSpec((1, 1, TC), lambda cj, bi: (bi, 0, cj)),  # lane-dense
        ),
        compiler_params=compiler_params,
    )(x_mm, pw["wt"], x_inv, pw["w_inv"])

    # ---- Tiny O(B) tail in plain JAX ---------------------------------------
    lbl = jnp.asarray(label).astype(jnp.int32).reshape(-1)
    # Label logits gathered from the SAME logits the kernel produced, so the
    # exp() subtraction below cancels the kernel's row sums exactly (and theta
    # matches torch, which also derives it from the computed logits matrix).
    lbl_logit = logits_pad[jnp.arange(B), lbl]                       # (B,)

    full_sum = jnp.sum(exp_parts)
    pad_cells = float(B_pad * C_pad - B * C)         # padded logits == 0 -> exp == 1
    exp_sum = full_sum - pad_cells - jnp.sum(jnp.exp(s_init * lbl_logit))
    B_avg = exp_sum / B

    theta = jnp.arccos(jnp.clip(lbl_logit, -1.0 + 1e-7, 1.0 - 1e-7))
    # torch.median returns the LOWER of the two middle values for even counts.
    theta_med = jnp.sort(theta)[(B - 1) // 2]
    s_new = jnp.log(B_avg) / jnp.cos(
        jnp.minimum(jnp.float32(math.pi / 4.0), theta_med))

    logits = logits_pad
    if B_pad != B or C_pad != C:
        logits = logits_pad[:B, :C]
    if return_scale:
        # Lets callers fold the scale into the downstream loss and skip the
        # extra full B x C read+write pass.
        return logits, s_new
    return s_new * logits


# ---------------------------------------------------------------------------
# Pure-JAX reference mirroring the PyTorch module (f32 throughout)
# ---------------------------------------------------------------------------
def _reference_forward(x, weight, label=None):
    B = x.shape[0]
    C = weight.shape[0]
    x_n = x / jnp.maximum(jnp.linalg.norm(x, axis=1, keepdims=True), _EPS)
    w_n = weight / jnp.maximum(jnp.linalg.norm(weight, axis=1, keepdims=True), _EPS)
    logits = x_n @ w_n.T
    if label is None:
        return logits
    s = math.sqrt(2.0) * math.log(C - 1) if C > 1 else 1.0
    theta = jnp.arccos(jnp.clip(logits, -1.0 + 1e-7, 1.0 - 1e-7))
    one_hot = jax.nn.one_hot(label, C, dtype=logits.dtype)
    B_avg = jnp.sum(jnp.where(one_hot < 1, jnp.exp(s * logits), 0.0)) / B
    theta_sel = theta[jnp.arange(B), label]
    theta_med = jnp.sort(theta_sel)[(B - 1) // 2]  # torch lower median
    s_new = jnp.log(B_avg) / jnp.cos(jnp.minimum(math.pi / 4.0, theta_med))
    return s_new * logits


if __name__ == "__main__":
    key = jax.random.PRNGKey(0)

    # ---- Case 1: single-tile shapes (small module config) ------------------
    F1, C1, B1 = 32, 16, 8
    k1, k2, k3, key = jax.random.split(key, 4)
    bound = math.sqrt(6.0 / (F1 + C1))  # deterministic xavier_uniform_
    w1 = jax.random.uniform(k2, (C1, F1), jnp.float32, -bound, bound)
    x1 = jax.random.normal(k1, (B1, F1), jnp.float32)
    l1 = jax.random.randint(k3, (B1,), 0, C1, jnp.int32)

    logits_only = adacos_forward(x1, w1, label=None)               # inference path
    out_bf16 = adacos_forward(x1, w1, label=l1)                    # bf16 MXU path
    out_f32 = adacos_forward(x1, w1, label=l1, matmul_dtype=jnp.float32)
    lg_unscaled, s_new1 = adacos_forward(x1, w1, label=l1,
                                         matmul_dtype=jnp.float32,
                                         return_scale=True)
    jax.block_until_ready((logits_only, out_bf16, out_f32, lg_unscaled, s_new1))

    ref_logits = _reference_forward(x1, w1)
    ref1 = _reference_forward(x1, w1, l1)
    assert logits_only.shape == (B1, C1)
    assert out_bf16.shape == (B1, C1)
    assert jnp.allclose(logits_only, ref_logits, atol=2e-2, rtol=2e-2)
    assert jnp.allclose(out_f32, ref1, atol=1e-3, rtol=1e-3), "f32 mismatch"
    assert jnp.allclose(out_bf16, ref1, atol=1e-1, rtol=1e-1), "bf16 mismatch"
    assert jnp.allclose(s_new1 * lg_unscaled, out_f32, atol=1e-5, rtol=1e-5)

    # ---- Case 2: multi-tile grid with B/C padding + cached prepared weight --
    F2_, C2, B2 = 32, 200, 13
    k1, k2, k3, key = jax.random.split(key, 4)
    bound = math.sqrt(6.0 / (F2_ + C2))
    w2 = jax.random.uniform(k2, (C2, F2_), jnp.float32, -bound, bound)
    x2 = jax.random.normal(k1, (B2, F2_), jnp.float32)
    l2 = jax.random.randint(k3, (B2,), 0, C2, jnp.int32)

    out2_f32 = adacos_forward(x2, w2, label=l2, tile_b=8, tile_c=128,
                              matmul_dtype=jnp.float32)
    out2_bf16 = adacos_forward(x2, w2, label=l2, tile_b=8, tile_c=128)
    pw2 = adacos_prepare_weight(w2, tile_c=128, matmul_dtype=jnp.float32)
    out2_prep = adacos_forward(x2, prepared_weight=pw2, label=l2, tile_b=8)
    jax.block_until_ready((out2_f32, out2_bf16, out2_prep))

    ref2 = _reference_forward(x2, w2, l2)
    assert out2_f32.shape == (B2, C2)
    assert jnp.allclose(out2_f32, ref2, atol=1e-3, rtol=1e-3), "tiled f32 mismatch"
    assert jnp.allclose(out2_bf16, ref2, atol=1e-1, rtol=1e-1), "tiled bf16 mismatch"
    assert jnp.allclose(out2_prep, out2_f32, atol=1e-5, rtol=1e-5), "prepared-W mismatch"

    print("KERNEL_OK")
</pallas_src>

<mosaic_0001>
module attributes {stable_mosaic.version = 11 : i64} {
  func.func @_adacos_logits_kernel(%arg0: i32, %arg1: i32, %arg2: memref<8x32xbf16, #tpu.memory_space<vmem>>, %arg3: memref<32x16xbf16, #tpu.memory_space<vmem>>, %arg4: memref<8x1xf32, #tpu.memory_space<vmem>>, %arg5: memref<1x16xf32, #tpu.memory_space<vmem>>, %arg6: memref<8x16xf32, #tpu.memory_space<vmem>>) attributes {dimension_semantics = [#tpu.dimension_semantics<parallel>, #tpu.dimension_semantics<parallel>], iteration_bounds = array<i64: 1, 1>, scalar_prefetch = 0 : i64, scratch_operands = 0 : i64, tpu.core_type = #tpu.core_type<tc>, window_params = [{transform_indices = @transform_0, window_bounds = array<i64: 8, 32>}, {transform_indices = @transform_1, window_bounds = array<i64: 32, 16>}, {transform_indices = @transform_2, window_bounds = array<i64: 8, 1>}, {transform_indices = @transform_3, window_bounds = array<i64: 1, 16>}, {transform_indices = @transform_4, window_bounds = array<i64: 8, 16>}]} {
    %c0 = arith.constant 0 : index
    %c0_0 = arith.constant 0 : index
    %0 = vector.load %arg2[%c0, %c0_0] : memref<8x32xbf16, #tpu.memory_space<vmem>>, vector<8x32xbf16>
    %c0_1 = arith.constant 0 : index
    %c0_2 = arith.constant 0 : index
    %1 = vector.load %arg3[%c0_1, %c0_2] : memref<32x16xbf16, #tpu.memory_space<vmem>>, vector<32x16xbf16>
    %cst = arith.constant dense<0.000000e+00> : vector<8x16xf32>
    %2 = tpu.matmul %0, %1, %cst {dimension_numbers = #tpu.dot_dimension_numbers<[1], [0], [0], [1], [0, 0, 1, 1], [], []>} : vector<8x32xbf16>, vector<32x16xbf16>, vector<8x16xf32> -> vector<8x16xf32>
    %c0_3 = arith.constant 0 : index
    %c0_4 = arith.constant 0 : index
    %3 = vector.load %arg4[%c0_3, %c0_4] : memref<8x1xf32, #tpu.memory_space<vmem>>, vector<8x1xf32>
    %4 = vector.broadcast %3 : vector<8x1xf32> to vector<8x16xf32>
    %5 = arith.mulf %2, %4 : vector<8x16xf32>
    %c0_5 = arith.constant 0 : index
    %c0_6 = arith.constant 0 : index
    %6 = vector.load %arg5[%c0_5, %c0_6] : memref<1x16xf32, #tpu.memory_space<vmem>>, vector<1x16xf32>
    %7 = vector.broadcast %6 : vector<1x16xf32> to vector<8x16xf32>
    %8 = arith.mulf %5, %7 : vector<8x16xf32>
    %c0_7 = arith.constant 0 : index
    %c0_8 = arith.constant 0 : index
    %9 = vector.load %arg6[%c0_7, %c0_8] : memref<8x16xf32, #tpu.memory_space<vmem>>, vector<8x16xf32>
    tpu.vector_store %arg6[%c0_7, %c0_8], %8 {strides = array<i32>} : memref<8x16xf32, #tpu.memory_space<vmem>>, vector<8x16xf32>,
    return
  }
  func.func @transform_0(%arg0: i32, %arg1: i32) -> (i32, i32) {
    %c0_i32 = arith.constant 0 : i32
    %c0_i32_0 = arith.constant 0 : i32
    return %arg1, %c0_i32 : i32, i32
  }
  func.func @transform_1(%arg0: i32, %arg1: i32) -> (i32, i32) {
    %c0_i32 = arith.constant 0 : i32
    %c0_i32_0 = arith.constant 0 : i32
    return %c0_i32, %arg0 : i32, i32
  }
  func.func @transform_2(%arg0: i32, %arg1: i32) -> (i32, i32) {
    %c0_i32 = arith.constant 0 : i32
    %c0_i32_0 = arith.constant 0 : i32
    return %arg1, %c0_i32 : i32, i32
  }
  func.func @transform_3(%arg0: i32, %arg1: i32) -> (i32, i32) {
    %c0_i32 = arith.constant 0 : i32
    %c0_i32_0 = arith.constant 0 : i32
    return %c0_i32, %arg0 : i32, i32
  }
  func.func @transform_4(%arg0: i32, %arg1: i32) -> (i32, i32) {
    %c0_i32 = arith.constant 0 : i32
    return %arg1, %arg0 : i32, i32
  }
}

</mosaic_0001>

<llo_original>
// kernel: tpu_custom_call.1
$region0: #{tpu_custom_call.1}
  #allocation0 [shape = 'u32[]', space=smem, size = 0x4, offset = 0x4, fixed_abs, tag = 'smem constant byte address 0x4 - core index']
  #allocation1 [shape = 'u32[144,128]{1,0:T(1,128)}', space=vmem, size = 0x12000, scoped, tag = 'internal scratch']
  %s0 = inlined_call_operand.vmem [shape: bf16[8,32], index: 0, kind: input, shape index: {}]
  %s1 = inlined_call_operand.vmem [shape: bf16[32,16], index: 1, kind: input, shape index: {}]
  %s2 = inlined_call_operand.vmem [shape: f32[8,1], index: 2, kind: input, shape index: {}]
  %s3 = inlined_call_operand.vmem [shape: f32[1,16], index: 3, kind: input, shape index: {}]
  %s4 = inlined_call_operand.hbm [shape: f32[8,16], index: 4, kind: output, shape index: {}]
  %s5 = sld [smem:[#allocation0]]
  $region26: #{tpu_custom_call.1} parent=0
    _
  %s7 = ssub.s32 1, %s5
  %s8 = scalar_select 0, %s7, %s5
  $region1: #{tpu_custom_call.1} parent=0
    #allocation2 [shape = 'u8[4096]{0}', space=vmem, size = 0x1000, scoped, tag = 'output window, operand 0, single buffered']
    #allocation3 [shape = 's32[1]{0}', space=sflag, size = 0x4, scoped, tag = 'scoped memory for tpu_custom_call.1']
    %9 = vsyncpa [#allocation3], 0
    // Predicated region
    $region2: #{tpu_custom_call.1} parent=1 // pred_check
      _
    $region3: #{tpu_custom_call.1} parent=1 // pred_check_branch
      %11 = sbr.rel (0) target = $region5
    $region4: #{tpu_custom_call.1} parent=1 // pred_region
      _
    $region5: #{tpu_custom_call.1} parent=1 // pred_fallthru
      _
    // Predicated region
    $region6: #{tpu_custom_call.1} parent=1 // pred_check
      _
    $region7: #{tpu_custom_call.1} parent=1 // pred_check_branch
      %13 = sbr.rel (0) target = $region9
    $region8: #{tpu_custom_call.1} parent=1 // pred_region
      _
    $region9: #{tpu_custom_call.1} parent=1 // pred_fallthru
      _
    // Predicated region
    $region10: #{tpu_custom_call.1} parent=1 // pred_check
      _
    $region11: #{tpu_custom_call.1} parent=1 // pred_check_branch
      %15 = sbr.rel (0) target = $region13
    $region12: #{tpu_custom_call.1} parent=1 // pred_region
      _
    $region13: #{tpu_custom_call.1} parent=1 // pred_fallthru
      _
    // Predicated region
    $region14: #{tpu_custom_call.1} parent=1 // pred_check
      _
    $region15: #{tpu_custom_call.1} parent=1 // pred_check_branch
      %17 = sbr.rel (0) target = $region17
    $region16: #{tpu_custom_call.1} parent=1 // pred_region
      _
    $region17: #{tpu_custom_call.1} parent=1 // pred_fallthru
      _
    %v19 = vld [vmem:[%s0] sm:$0xf]
    %v20 = vld [vmem:[%s1] sm:$0xf]
    %v21 = vld [vmem:[%s1 + $0x4] sm:$0xf]
    %v22 = vld [vmem:[%s1 + $0x8] sm:$0xf]
    %v23 = vld [vmem:[%s1 + $0xc] sm:$0xf]
    %v28 = vunpack.c.l.b16 %v20
    %v29 = vunpack.c.l.b16 %v21
    %v30 = vunpack.c.l.b16 %v22
    %v31 = vunpack.c.l.b16 %v23
    %v32 = vpack.c.b16 %v29, %v28
    %v33 = vpack.c.b16 %v31, %v30
    %vm36 = vcmask 261120
    %v38 = vsel %vm36, %v19, 0
    %40 = vmatprep.subr.bf16.mxu0 0
    %41 = vmatpush1.bf16.msra.mxu0 %v32
    %42 = vmatprep.subr.bf16.mxu0 0
    %43 = vmatpush1.bf16.msra.mxu0 %v33
    %44 = vmatprep.subr.bf16.mxu0 0
    %45 = vmatpush1.bf16.msra.mxu0 0
    %46 = vmatprep.subr.bf16.mxu0 0
    %47 = vmatpush1.bf16.msra.mxu0 0
    %48 = vmatprep.subr.bf16.mxu0 0
    %49 = vmatpush1.bf16.msra.mxu0 0
    %50 = vmatprep.subr.bf16.mxu0 0
    %51 = vmatpush1.bf16.msra.mxu0 0
    %52 = vmatprep.subr.bf16.mxu0 0
    %53 = vmatpush1.bf16.msra.mxu0 0
    %54 = vmatprep.subr.bf16.mxu0 0
    %55 = vmatpush1.bf16.msra.mxu0 0
    %56 = vmatprep.subr.bf16.mxu0 0
    %57 = vmatpush1.bf16.msra.mxu0 0
    %58 = vmatprep.subr.bf16.mxu0 0
    %59 = vmatpush1.bf16.msra.mxu0 0
    %60 = vmatprep.subr.bf16.mxu0 0
    %61 = vmatpush1.bf16.msra.mxu0 0
    %62 = vmatprep.subr.bf16.mxu0 0
    %63 = vmatpush1.bf16.msra.mxu0 0
    %64 = vmatprep.subr.bf16.mxu0 0
    %65 = vmatpush1.bf16.msra.mxu0 0
    %66 = vmatprep.subr.bf16.mxu0 0
    %67 = vmatpush1.bf16.msra.mxu0 0
    %68 = vmatprep.subr.bf16.mxu0 0
    %69 = vmatpush1.bf16.msra.mxu0 0
    %70 = vmatprep.subr.bf16.mxu0 0
    %71 = vmatpush1.bf16.msra.mxu0 0
    %72 = vmatprep.mubr.bf16.mxu0 0
    %73 = vmatmul.mubr.bf16.gmra.mrb[0].mxu0 %v38
    %v74 = vpop.f32.mrb[0].mxu0
    %v75 = vadd.f32 0.0, %v74
    %v76 = vpop.f32.mrb[0].mxu0
    %v77 = vpop.f32.mrb[0].mxu0
    %v78 = vpop.f32.mrb[0].mxu0
    %79 = vdwg.mxu0
    %v80 = vld [vmem:[%s2] sm:$0xff]
    %82 = vset.pattern.permute.xlu0 0
    %83 = vperm.xlu0 %82, %v80
    %v84 = vpop.permute.xlu0 %83
    %v86 = vmul.f32 %v75, %v84
    %v87 = vld [vmem:[%s3] sm:$0x1]
    %v89 = vlaneseq
    %v90 = vshrl.u32 %v89, 7
    %v91 = vsub.s32 0, %v90
    %v92 = vrot.slane %v87, %v91
    %v94 = vmul.f32 %v86, %v92
    %vm95 = vcmask 130048
    %96 = vst.msk [vmem:[#allocation2] sm:$0xff] %vm95, %v94
    // Predicated region
    $region18: #{tpu_custom_call.1} parent=1 // pred_check
      _
    $region19: #{tpu_custom_call.1} parent=1 // pred_check_branch
      %98 = sbr.rel (0) target = $region21
    $region20: #{tpu_custom_call.1} parent=1 // pred_region
      %s100 = ssub.s32 128, 128
      %101 = vsyncadd [#allocation3], %s100
      %s103 = sshll.u32 [#allocation2], 4
      %s104 = int_to_ptr.vmem [resolvable:$true] %s103
      %106 = dma.vmem_to_hbm [thread:$0]  %s104, 128, %s4, [#allocation3]
    $region21: #{tpu_custom_call.1} parent=1 // pred_fallthru
      _
    // Predicated region
    $region22: #{tpu_custom_call.1} parent=1 // pred_check
      _
    $region23: #{tpu_custom_call.1} parent=1 // pred_check_branch
      %108 = sbr.rel (0) target = $region25
    $region24: #{tpu_custom_call.1} parent=1 // pred_region
      %109 = dma.done [#allocation3], 128
    $region25: #{tpu_custom_call.1} parent=1 // pred_fallthru
      _
    %110 = vsyncpa [#allocation3], 1

</llo_original>
